<compile_context>
chip_gen: v5e
topology: v5e:2x2
jax: 0.10.0
libtpu: 0.0.40
codegen_flags: <defaults>
</compile_context>

<pallas_src>
import jax
import jax.numpy as jnp
from jax.experimental import pallas as pl
from jax.experimental.pallas import tpu as pltpu


def _elementwise_kernel(x_ref, o_ref):
    # ((x*2 + 5) - 1 - 2) / 3  ==  x*(2/3) + (2/3)   (2 VPU ops, no divide/EUP)
    x = x_ref[...]
    o_ref[...] = x * (2.0 / 3.0) + (2.0 / 3.0)


def _round_up(n, m):
    return -(-n // m) * m


def _chip_tuning():
    """Pick (target block bytes, vmem_limit override) from the local device."""
    try:
        kind = jax.devices()[0].device_kind.lower()
    except Exception:  # no TPU visible at trace time -> conservative defaults
        kind = ""
    if "v7" in kind:
        # ~3.2 TB/s HBM: need ~8 MiB blocks to amortize the ~0.35 us/step
        # overhead.  Double-buffered in+out = 32 MiB VMEM, so raise the scoped
        # limit past the 32 MiB default while staying under the 64 MiB cap.
        return 8 << 20, 40 << 20
    # v5e / v6e: 2 MiB blocks (8 MiB VMEM double-buffered in+out) fit the
    # 16/32 MiB default scoped limits and sit at ~85% of HBM roofline.
    return 2 << 20, None


def pt_module_forward(x):
    """Applies the PtModule forward pass via a Pallas TPU kernel.

    Accepts any-rank tensor (e.g. NCHW); returns same shape.  Integer inputs
    are promoted to float32 (matching torch.div true-division semantics).
    """
    orig_shape = x.shape
    if not jnp.issubdtype(x.dtype, jnp.floating):
        x = x.astype(jnp.float32)
    dtype = x.dtype
    itemsize = jnp.dtype(dtype).itemsize
    total = int(x.size)

    # --- choose a lane width that divides the element count (no pad copies) ---
    if total % 512 == 0:
        lane = 512
    elif total % 256 == 0:
        lane = 256
    elif total % 128 == 0:
        lane = 128
    else:
        lane = 128  # rare tail path: pad by <128 elements, slice afterwards

    flat = x.reshape(-1)
    padded = _round_up(total, lane)
    if padded != total:
        # Only hit when total % 128 != 0; costs one extra pad + slice pass.
        flat = jnp.pad(flat, (0, padded - total))
    rows = padded // lane
    x2d = flat.reshape(rows, lane)

    # --- per-chip block sizing ---------------------------------------------
    target_block_bytes, vmem_limit = _chip_tuning()
    tile_rows = max(8, (target_block_bytes // (lane * itemsize)) // 8 * 8)

    if rows <= 8:
        block_rows = rows  # single tiny full-array block
    else:
        # At least 2 grid steps (v7x megacore sharding), capped at tile_rows
        # so each block's DMA amortizes the per-step overhead.
        half = _round_up(pl.cdiv(rows, 2), 8)
        block_rows = min(tile_rows, half, rows)
    grid = (pl.cdiv(rows, block_rows),)

    cp_kwargs = dict(dimension_semantics=("parallel",))
    if vmem_limit is not None:
        cp_kwargs["vmem_limit_bytes"] = vmem_limit
    compiler_params = pltpu.CompilerParams(**cp_kwargs)

    out2d = pl.pallas_call(
        _elementwise_kernel,
        out_shape=jax.ShapeDtypeStruct((rows, lane), dtype),
        grid=grid,
        in_specs=[pl.BlockSpec((block_rows, lane), lambda i: (i, 0))],
        out_specs=pl.BlockSpec((block_rows, lane), lambda i: (i, 0)),
        compiler_params=compiler_params,
    )(x2d)

    out_flat = out2d.reshape(-1)
    if padded != total:
        out_flat = out_flat[:total]
    return out_flat.reshape(orig_shape)


if __name__ == "__main__":
    key = jax.random.PRNGKey(0)
    # Small NCHW input consistent with a generic elementwise module.
    x = jax.random.normal(key, (2, 4, 16, 16), dtype=jnp.float32)

    y = pt_module_forward(x)
    y = jax.block_until_ready(y)

    # Reference in plain JAX mirroring the exact PyTorch op sequence.
    ref = x * 2.0 + 5.0
    for i in range(2):
        ref = ref - (i + 1)
    ref = ref / 3.0

    assert y.shape == x.shape and y.dtype == x.dtype
    # Folded constants differ from the literal op sequence by ~1 ulp.
    assert jnp.allclose(y, ref, atol=1e-6, rtol=1e-5)

    print("KERNEL_OK")
</pallas_src>

<mosaic_0001>
module attributes {stable_mosaic.version = 11 : i64} {
  func.func @_elementwise_kernel(%arg0: i32, %arg1: memref<4x512xf32, #tpu.memory_space<vmem>>, %arg2: memref<4x512xf32, #tpu.memory_space<vmem>>) attributes {dimension_semantics = [#tpu.dimension_semantics<parallel>], iteration_bounds = array<i64: 1>, scalar_prefetch = 0 : i64, scratch_operands = 0 : i64, tpu.core_type = #tpu.core_type<tc>, window_params = [{transform_indices = @transform_0, window_bounds = array<i64: 4, 512>}, {transform_indices = @transform_1, window_bounds = array<i64: 4, 512>}]} {
    %c0 = arith.constant 0 : index
    %c0_0 = arith.constant 0 : index
    %0 = vector.load %arg1[%c0, %c0_0] : memref<4x512xf32, #tpu.memory_space<vmem>>, vector<4x512xf32>
    %cst = arith.constant 0.666666686 : f32
    %1 = vector.broadcast %cst : f32 to vector<4x512xf32>
    %2 = arith.mulf %0, %1 : vector<4x512xf32>
    %cst_1 = arith.constant 0.666666686 : f32
    %3 = vector.broadcast %cst_1 : f32 to vector<4x512xf32>
    %4 = arith.addf %2, %3 : vector<4x512xf32>
    %c0_2 = arith.constant 0 : index
    %c0_3 = arith.constant 0 : index
    %5 = vector.load %arg2[%c0_2, %c0_3] : memref<4x512xf32, #tpu.memory_space<vmem>>, vector<4x512xf32>
    tpu.vector_store %arg2[%c0_2, %c0_3], %4 {strides = array<i32>} : memref<4x512xf32, #tpu.memory_space<vmem>>, vector<4x512xf32>,
    return
  }
  func.func @transform_0(%arg0: i32) -> (i32, i32) {
    %c0_i32 = arith.constant 0 : i32
    %c0_i32_0 = arith.constant 0 : i32
    return %arg0, %c0_i32 : i32, i32
  }
  func.func @transform_1(%arg0: i32) -> (i32, i32) {
    %c0_i32 = arith.constant 0 : i32
    %c0_i32_0 = arith.constant 0 : i32
    return %arg0, %c0_i32 : i32, i32
  }
}

</mosaic_0001>

<llo_original>
// kernel: tpu_custom_call.1
$region0: #{tpu_custom_call.1}
  #allocation0 [shape = 'u32[]', space=smem, size = 0x4, offset = 0x4, fixed_abs, tag = 'smem constant byte address 0x4 - core index']
  #allocation1 [shape = 'u32[72,128]{1,0:T(1,128)}', space=vmem, size = 0x9000, scoped, tag = 'internal scratch']
  %s0 = inlined_call_operand.hbm [shape: f32[4,512], index: 0, kind: input, shape index: {}]
  %s1 = inlined_call_operand.hbm [shape: f32[4,512], index: 1, kind: output, shape index: {}]
  %s2 = sld [smem:[#allocation0]]
  $region18: #{tpu_custom_call.1} parent=0
    _
  %s4 = ssub.s32 1, %s2
  %s5 = scalar_select 0, %s4, %s2
  $region1: #{tpu_custom_call.1} parent=0
    #allocation2 [shape = 'u8[8192]{0}', space=vmem, size = 0x2000, scoped, tag = 'input window, operand 0, single buffered']
    #allocation3 [shape = 's32[1]{0}', space=sflag, size = 0x4, scoped, tag = 'scoped memory for tpu_custom_call.1']
    #allocation4 [shape = 's32[1]{0}', space=sflag, size = 0x4, scoped, tag = 'scoped memory for tpu_custom_call.1']
    #allocation5 [shape = 'u8[8192]{0}', space=vmem, size = 0x2000, scoped, tag = 'output window, operand 0, single buffered']
    %6 = vsyncpa [#allocation3], 0
    %7 = vsyncpa [#allocation4], 0
    // Predicated region
    $region2: #{tpu_custom_call.1} parent=1 // pred_check
      _
    $region3: #{tpu_custom_call.1} parent=1 // pred_check_branch
      %9 = sbr.rel (0) target = $region5
    $region4: #{tpu_custom_call.1} parent=1 // pred_region
      %11 = vsyncadd [#allocation3], 0
      %s13 = sshll.u32 %s0, 4
      %s14 = int_to_ptr.hbm [resolvable:$true] %s13
      %s15 = sshll.u32 [#allocation2], 4
      %s16 = int_to_ptr.vmem [resolvable:$true] %s15
      %18 = dma.hbm_to_vmem [thread:$0]  %s14, 256, %s16, [#allocation3]
    $region5: #{tpu_custom_call.1} parent=1 // pred_fallthru
      _
    // Predicated region
    $region6: #{tpu_custom_call.1} parent=1 // pred_check
      _
    $region7: #{tpu_custom_call.1} parent=1 // pred_check_branch
      %20 = sbr.rel (0) target = $region9
    $region8: #{tpu_custom_call.1} parent=1 // pred_region
      %22 = dma.done [#allocation3], 256
    $region9: #{tpu_custom_call.1} parent=1 // pred_fallthru
      _
    %v23 = vld [vmem:[#allocation2] sm:$0xff]
    %v24 = vld [vmem:[#allocation2 + $0x8] sm:$0xff]
    %v25 = vmul.f32 %v23, 0.6666667
    %v26 = vmul.f32 %v24, 0.6666667
    %v27 = vadd.f32 %v25, 0.6666667
    %v28 = vadd.f32 %v26, 0.6666667
    %29 = vst [vmem:[#allocation5] sm:$0xff] %v27
    %30 = vst [vmem:[#allocation5 + $0x8] sm:$0xff] %v28
    // Predicated region
    $region10: #{tpu_custom_call.1} parent=1 // pred_check
      _
    $region11: #{tpu_custom_call.1} parent=1 // pred_check_branch
      %32 = sbr.rel (0) target = $region13
    $region12: #{tpu_custom_call.1} parent=1 // pred_region
      %34 = vsyncadd [#allocation4], 0
      %s36 = sshll.u32 [#allocation5], 4
      %s37 = int_to_ptr.vmem [resolvable:$true] %s36
      %s38 = sshll.u32 %s1, 4
      %s39 = int_to_ptr.hbm [resolvable:$true] %s38
      %41 = dma.vmem_to_hbm [thread:$0]  %s37, 256, %s39, [#allocation4]
    $region13: #{tpu_custom_call.1} parent=1 // pred_fallthru
      _
    // Predicated region
    $region14: #{tpu_custom_call.1} parent=1 // pred_check
      _
    $region15: #{tpu_custom_call.1} parent=1 // pred_check_branch
      %43 = sbr.rel (0) target = $region17
    $region16: #{tpu_custom_call.1} parent=1 // pred_region
      %45 = dma.done [#allocation4], 256
    $region17: #{tpu_custom_call.1} parent=1 // pred_fallthru
      _
    %46 = vsyncpa [#allocation3], 1
    %47 = vsyncpa [#allocation4], 1

</llo_original>
